<compile_context>
chip_gen: v7x
topology: tpu7x:2x2x1
jax: 0.10.0
libtpu: 0.0.40
codegen_flags: <defaults>
</compile_context>

<pallas_src>
import math

import jax
import jax.numpy as jnp
from jax.experimental import pallas as pl
from jax.experimental.pallas import tpu as pltpu


def _round_up(x, m):
    return ((x + m - 1) // m) * m


# ---------------------------------------------------------------------------
# Kernel
# ---------------------------------------------------------------------------

def nac_fused_kernel(x_ref, w_hat_ref, m_hat_ref, o_ref):
    """Per-batch-tile fused NAC: gate the resident weight and matmul.

    x_ref:     (tile, in_dim)       — batch tile
    w_hat_ref: (out_dim, in_dim)    — resident (constant index_map)
    m_hat_ref: (out_dim, in_dim)    — resident (constant index_map)
    o_ref:     (tile, out_pad)      — out_pad is a multiple of 128 (lane-dense)
    """
    # Gate in f32: tanh/sigmoid on the EUP, multiply on the VPU — both slots
    # are idle under the MXU push, so recomputing per tile is free filler.
    w_hat = w_hat_ref[...].astype(jnp.float32)
    m_hat = m_hat_ref[...].astype(jnp.float32)
    w = jnp.tanh(w_hat) * jax.nn.sigmoid(m_hat)          # (out_dim, in_dim)

    # Zero-pad the N (out_dim) axis up to the output block's lane width so the
    # output stores are unmasked full-width vst.  Padded rows of W are zero,
    # so the padded output columns are exactly zero (sliced off in wrapper).
    out_dim = w.shape[0]
    out_pad = o_ref.shape[-1]
    if out_pad != out_dim:                                # static Python branch
        w = jnp.concatenate(
            [w, jnp.zeros((out_pad - out_dim, w.shape[1]), w.dtype)], axis=0)

    # x(M, K) . W(N, K) -> (M, N): contract against the untransposed weight
    # (trans-B), so no wrapper-side transpose copies and no in-kernel XLU
    # transpose of the weight is required.  Accumulate in f32.
    # Note: default matmul precision is fine at these K; for very large
    # in_dim consider precision=jax.lax.Precision.HIGHEST (hidden: mem-bound).
    y = jax.lax.dot_general(
        x_ref[...],
        w.astype(x_ref.dtype),
        dimension_numbers=(((1,), (1,)), ((), ())),
        preferred_element_type=jnp.float32,
    )
    o_ref[...] = y.astype(o_ref.dtype)


# ---------------------------------------------------------------------------
# Wrapper
# ---------------------------------------------------------------------------

def nac_forward(x, w_hat, m_hat, *, batch_tile=512):
    """NAC forward: y = x @ (tanh(W_hat) * sigmoid(M_hat)).T"""
    batch, in_dim = x.shape
    out_dim = w_hat.shape[0]

    # Lane-dense output width (multiple of 128); padded columns are zero and
    # are sliced off below.
    out_pad = _round_up(out_dim, 128)

    # Batch tile: multiple of 8 sublanes, no larger than the (rounded) batch,
    # and capped near batch/2 when the batch is big enough so the "parallel"
    # grid axis has >= 2 steps (lets v7x's two TensorCores both work and keeps
    # the pipeline busy).
    tile = min(int(batch_tile), _round_up(batch, 8))
    if batch >= 16:
        tile = min(tile, _round_up(pl.cdiv(batch, 2), 8))
    tile = max(tile, 8)
    nb = pl.cdiv(batch, tile)

    # VMEM budget: double-buffered x/out tiles + the resident W_hat/M_hat,
    # with slack; capped at 64 MiB (v7x physical VMEM).
    itemsize = x.dtype.itemsize
    w_bytes = (w_hat.dtype.itemsize + m_hat.dtype.itemsize) * out_dim * in_dim
    vmem_est = 2 * tile * (in_dim + out_pad) * itemsize + 2 * w_bytes + (1 << 20)
    vmem_limit = int(min(max(vmem_est, 32 * 1024 * 1024), 64 * 1024 * 1024))
    # TODO(synk): for very large in_dim/out_dim the resident weight should be
    # tiled along N ("parallel") and K ("arbitrary" + f32 accumulator) instead
    # of being kept fully resident; not needed at NAC-typical layer sizes.

    y = pl.pallas_call(
        nac_fused_kernel,
        out_shape=jax.ShapeDtypeStruct((batch, out_pad), x.dtype),
        grid=(nb,),
        in_specs=[
            pl.BlockSpec((tile, in_dim), lambda b: (b, 0)),        # x tile
            pl.BlockSpec((out_dim, in_dim), lambda b: (0, 0)),     # resident
            pl.BlockSpec((out_dim, in_dim), lambda b: (0, 0)),     # resident
        ],
        out_specs=pl.BlockSpec((tile, out_pad), lambda b: (b, 0)),
        compiler_params=pltpu.CompilerParams(
            dimension_semantics=("parallel",),
            vmem_limit_bytes=vmem_limit,
        ),
    )(x, w_hat, m_hat)

    return y[:, :out_dim] if out_pad != out_dim else y


def kaiming_uniform(key, shape, fan_in):
    # Matches torch.nn.init.kaiming_uniform_ defaults (a=0, leaky_relu):
    # bound = sqrt(2) * sqrt(3 / fan_in) = sqrt(6 / fan_in)
    bound = math.sqrt(6.0 / fan_in)
    return jax.random.uniform(key, shape, jnp.float32, -bound, bound)


if __name__ == "__main__":
    batch, in_dim, out_dim = 8, 32, 16

    key = jax.random.PRNGKey(0)
    k_x, k_w, k_m, k_x2, k_x3 = jax.random.split(key, 5)

    x = jax.random.normal(k_x, (batch, in_dim), dtype=jnp.float32)
    W_hat = kaiming_uniform(k_w, (out_dim, in_dim), fan_in=in_dim)
    M_hat = kaiming_uniform(k_m, (out_dim, in_dim), fan_in=in_dim)

    W_ref = jnp.tanh(W_hat) * jax.nn.sigmoid(M_hat)

    # Small batch: single grid step (nb=1), lane-padded output sliced back.
    y = nac_forward(x, W_hat, M_hat)
    jax.block_until_ready(y)
    y_ref = x @ W_ref.T
    assert y.shape == (batch, out_dim)
    assert jnp.allclose(y, y_ref, rtol=1e-5, atol=1e-4)

    # Larger batch: tiled batch grid with >= 2 "parallel" steps, weight
    # resident, gate recomputed per tile.
    big_batch = 256
    x_big = jax.random.normal(k_x2, (big_batch, in_dim), dtype=jnp.float32)
    y_big = nac_forward(x_big, W_hat, M_hat)
    jax.block_until_ready(y_big)
    y_big_ref = x_big @ W_ref.T
    assert y_big.shape == (big_batch, out_dim)
    assert jnp.allclose(y_big, y_big_ref, rtol=1e-5, atol=1e-4)

    # Ragged batch: cdiv grid with a masked last block (no single-block
    # fallback any more).
    ragged_batch = 200
    x_rag = jax.random.normal(k_x3, (ragged_batch, in_dim), dtype=jnp.float32)
    y_rag = nac_forward(x_rag, W_hat, M_hat)
    jax.block_until_ready(y_rag)
    y_rag_ref = x_rag @ W_ref.T
    assert y_rag.shape == (ragged_batch, out_dim)
    assert jnp.allclose(y_rag, y_rag_ref, rtol=1e-5, atol=1e-4)

    print("KERNEL_OK")
</pallas_src>

<mosaic_0001>
module attributes {stable_mosaic.version = 11 : i64} {
  func.func @nac_fused_kernel(%arg0: i32, %arg1: memref<8x32xf32, #tpu.memory_space<vmem>>, %arg2: memref<16x32xf32, #tpu.memory_space<vmem>>, %arg3: memref<16x32xf32, #tpu.memory_space<vmem>>, %arg4: memref<8x128xf32, #tpu.memory_space<vmem>>) attributes {dimension_semantics = [#tpu.dimension_semantics<parallel>], iteration_bounds = array<i64: 1>, scalar_prefetch = 0 : i64, scratch_operands = 0 : i64, tpu.core_type = #tpu.core_type<tc>, window_params = [{transform_indices = @transform_0, window_bounds = array<i64: 8, 32>}, {pipeline_mode = #tpu.pipeline_mode<synchronous>, transform_indices = @transform_1, window_bounds = array<i64: 16, 32>}, {pipeline_mode = #tpu.pipeline_mode<synchronous>, transform_indices = @transform_2, window_bounds = array<i64: 16, 32>}, {transform_indices = @transform_3, window_bounds = array<i64: 8, 128>}]} {
    %c0 = arith.constant 0 : index
    %c0_0 = arith.constant 0 : index
    %0 = vector.load %arg2[%c0, %c0_0] : memref<16x32xf32, #tpu.memory_space<vmem>>, vector<16x32xf32>
    %c0_1 = arith.constant 0 : index
    %c0_2 = arith.constant 0 : index
    %1 = vector.load %arg3[%c0_1, %c0_2] : memref<16x32xf32, #tpu.memory_space<vmem>>, vector<16x32xf32>
    %2 = math.tanh %0 : vector<16x32xf32>
    %3 = arith.negf %1 : vector<16x32xf32>
    %4 = math.exp %3 : vector<16x32xf32>
    %cst = arith.constant 1.000000e+00 : f32
    %5 = vector.broadcast %cst : f32 to vector<16x32xf32>
    %6 = arith.addf %5, %4 : vector<16x32xf32>
    %7 = arith.divf %5, %6 : vector<16x32xf32>
    %8 = arith.mulf %2, %7 : vector<16x32xf32>
    %cst_3 = arith.constant 0.000000e+00 : f32
    %9 = vector.broadcast %cst_3 : f32 to vector<112x32xf32>
    %10 = tpu.concatenate %8, %9 in 0 : vector<16x32xf32>, vector<112x32xf32> -> vector<128x32xf32>
    %c0_4 = arith.constant 0 : index
    %c0_5 = arith.constant 0 : index
    %11 = vector.load %arg1[%c0_4, %c0_5] : memref<8x32xf32, #tpu.memory_space<vmem>>, vector<8x32xf32>
    %cst_6 = arith.constant dense<0.000000e+00> : vector<8x128xf32>
    %12 = tpu.matmul %11, %10, %cst_6 {dimension_numbers = #tpu.dot_dimension_numbers<[1], [1], [0], [0], [0, 0, 1, 0], [], []>} : vector<8x32xf32>, vector<128x32xf32>, vector<8x128xf32> -> vector<8x128xf32>
    %c0_7 = arith.constant 0 : index
    %c0_8 = arith.constant 0 : index
    %13 = vector.load %arg4[%c0_7, %c0_8] : memref<8x128xf32, #tpu.memory_space<vmem>>, vector<8x128xf32>
    tpu.vector_store %arg4[%c0_7, %c0_8], %12 {strides = array<i32>} : memref<8x128xf32, #tpu.memory_space<vmem>>, vector<8x128xf32>,
    return
  }
  func.func @transform_0(%arg0: i32) -> (i32, i32) {
    %c0_i32 = arith.constant 0 : i32
    %c0_i32_0 = arith.constant 0 : i32
    return %arg0, %c0_i32 : i32, i32
  }
  func.func @transform_1(%arg0: i32) -> (i32, i32) {
    %c0_i32 = arith.constant 0 : i32
    %c0_i32_0 = arith.constant 0 : i32
    %c0_i32_1 = arith.constant 0 : i32
    return %c0_i32, %c0_i32_0 : i32, i32
  }
  func.func @transform_2(%arg0: i32) -> (i32, i32) {
    %c0_i32 = arith.constant 0 : i32
    %c0_i32_0 = arith.constant 0 : i32
    %c0_i32_1 = arith.constant 0 : i32
    return %c0_i32, %c0_i32_0 : i32, i32
  }
  func.func @transform_3(%arg0: i32) -> (i32, i32) {
    %c0_i32 = arith.constant 0 : i32
    %c0_i32_0 = arith.constant 0 : i32
    return %arg0, %c0_i32 : i32, i32
  }
}

</mosaic_0001>

<llo_original>
// kernel: tpu_custom_call.1
$region0: #{tpu_custom_call.1}
  #allocation0 [shape = 'u32[]', space=smem, size = 0x4, offset = 0x4, fixed_abs, tag = 'smem constant byte address 0x4 - core index']
  #allocation1 [shape = 'u32[144,128]{1,0:T(1,128)}', space=vmem, size = 0x12000, scoped, tag = 'internal scratch']
  %s0 = inlined_call_operand.hbm [shape: f32[8,32], index: 0, kind: input, shape index: {}]
  %s1 = inlined_call_operand.hbm [shape: f32[16,32], index: 1, kind: input, shape index: {}]
  %s2 = inlined_call_operand.hbm [shape: f32[16,32], index: 2, kind: input, shape index: {}]
  %s3 = inlined_call_operand.hbm [shape: f32[8,128], index: 3, kind: output, shape index: {}]
  %s4 = sld [smem:[#allocation0]]
  $region34: #{tpu_custom_call.1} parent=0
    _
  %s6 = ssub.s32 1, %s4
  %s7 = scalar_select 0, %s6, %s4
  $region1: #{tpu_custom_call.1} parent=0
    #allocation2 [shape = 'u8[4096]{0}', space=vmem, size = 0x1000, scoped, tag = 'input window, operand 0, single buffered']
    #allocation3 [shape = 's32[1]{0}', space=sflag, size = 0x4, scoped, tag = 'scoped memory for tpu_custom_call.1']
    #allocation4 [shape = 's32[1]{0}', space=sflag, size = 0x4, scoped, tag = 'scoped memory for tpu_custom_call.1']
    #allocation5 [shape = 'u8[8192]{0}', space=vmem, size = 0x2000, scoped, tag = 'input window, operand 1, single buffered']
    #allocation6 [shape = 's32[1]{0}', space=sflag, size = 0x4, scoped, tag = 'scoped memory for tpu_custom_call.1']
    #allocation7 [shape = 'u8[8192]{0}', space=vmem, size = 0x2000, scoped, tag = 'input window, operand 2, single buffered']
    #allocation8 [shape = 'u8[4096]{0}', space=vmem, size = 0x1000, scoped, tag = 'output window, operand 0, single buffered']
    %8 = vsyncpa [#allocation3], 0
    %9 = vsyncpa [#allocation6], 0
    %10 = vsyncpa [#allocation4], 0
    // Predicated region
    $region2: #{tpu_custom_call.1} parent=1 // pred_check
      _
    $region3: #{tpu_custom_call.1} parent=1 // pred_check_branch
      %12 = sbr.rel (0) target = $region5
    $region4: #{tpu_custom_call.1} parent=1 // pred_region
      %s14 = ssub.s32 128, 128
      %15 = vsyncadd [#allocation3], %s14
      %s17 = sshll.u32 [#allocation2], 4
      %s18 = int_to_ptr.vmem [resolvable:$true] %s17
      %20 = dma.hbm_to_vmem [thread:$0]  %s0, 128, %s18, [#allocation3]
    $region5: #{tpu_custom_call.1} parent=1 // pred_fallthru
      _
    // Predicated region
    $region6: #{tpu_custom_call.1} parent=1 // pred_check
      _
    $region7: #{tpu_custom_call.1} parent=1 // pred_check_branch
      %22 = sbr.rel (0) target = $region9
    $region8: #{tpu_custom_call.1} parent=1 // pred_region
      %s24 = ssub.s32 256, 256
      %25 = vsyncadd [#allocation6], %s24
      %s26 = sshll.u32 [#allocation5], 4
      %s27 = int_to_ptr.vmem [resolvable:$true] %s26
      %32 = dma.hbm_to_vmem [thread:$0]  %s1, 256, %s27, [#allocation6], 128, 128, 8
    $region9: #{tpu_custom_call.1} parent=1 // pred_fallthru
      _
    // Predicated region
    $region10: #{tpu_custom_call.1} parent=1 // pred_check
      _
    $region11: #{tpu_custom_call.1} parent=1 // pred_check_branch
      %34 = sbr.rel (0) target = $region13
    $region12: #{tpu_custom_call.1} parent=1 // pred_region
      %s36 = ssub.s32 256, 256
      %37 = vsyncadd [#allocation6], %s36
      %s38 = sshll.u32 [#allocation7], 4
      %s39 = int_to_ptr.vmem [resolvable:$true] %s38
      %44 = dma.hbm_to_vmem [thread:$0]  %s2, 256, %s39, [#allocation6], 128, 128, 8
    $region13: #{tpu_custom_call.1} parent=1 // pred_fallthru
      _
    // Predicated region
    $region14: #{tpu_custom_call.1} parent=1 // pred_check
      _
    $region15: #{tpu_custom_call.1} parent=1 // pred_check_branch
      %46 = sbr.rel (0) target = $region17
    $region16: #{tpu_custom_call.1} parent=1 // pred_region
      %47 = dma.done [#allocation3], 128
    $region17: #{tpu_custom_call.1} parent=1 // pred_fallthru
      _
    // Predicated region
    $region18: #{tpu_custom_call.1} parent=1 // pred_check
      _
    $region19: #{tpu_custom_call.1} parent=1 // pred_check_branch
      %49 = sbr.rel (0) target = $region21
    $region20: #{tpu_custom_call.1} parent=1 // pred_region
      %50 = dma.done [#allocation6], 256
    $region21: #{tpu_custom_call.1} parent=1 // pred_fallthru
      _
    // Predicated region
    $region22: #{tpu_custom_call.1} parent=1 // pred_check
      _
    $region23: #{tpu_custom_call.1} parent=1 // pred_check_branch
      %52 = sbr.rel (0) target = $region25
    $region24: #{tpu_custom_call.1} parent=1 // pred_region
      %53 = dma.done [#allocation6], 256
    $region25: #{tpu_custom_call.1} parent=1 // pred_fallthru
      _
    %v54 = vld [vmem:[#allocation5] sm:$0xff]
    %v55 = vld [vmem:[#allocation5 + $0x8] sm:$0xff]
    %v56 = vld [vmem:[#allocation7] sm:$0xff]
    %v57 = vld [vmem:[#allocation7 + $0x8] sm:$0xff]
    %v58 = vtanh.pop %v54
    %v59 = vtanh.pop %v55
    %v60 = vxor.u32 %v56, 2147483648
    %v61 = vxor.u32 %v57, 2147483648
    %v62 = vmul.f32 %v60, 1.442695
    %v63 = vpow.pop %v62
    %v64 = vmul.f32 %v61, 1.442695
    %v65 = vpow.pop %v64
    %v66 = vadd.f32 %v63, 1.0
    %v67 = vadd.f32 %v65, 1.0
    %v68 = vrcp.pop %v66
    %v69 = vmul.f32 1.0, %v68
    %v70 = vrcp.pop %v67
    %v71 = vmul.f32 1.0, %v70
    %v72 = vmul.f32 %v58, %v69
    %v73 = vmul.f32 %v59, %v71
    %v74 = vld [vmem:[#allocation2] sm:$0xff]
    %vm75 = vcmask 261120
    %v77 = vsel %vm75, %v74, 0
    %v80 = vsel %vm75, %v72, 0
    %v83 = vsel %vm75, %v73, 0
    %v86 = vsel %vm75, 0.0, 0
    %88 = vmatprep.subr.mxu0 0.0
    %89 = vmatpush1.xpose.msra.mxu0 %v80
    %90 = vmatprep.subr.mxu0 0.0
    %91 = vmatpush1.xpose.msra.mxu0 %v83
    %92 = vmatprep.subr.mxu0 0.0
    %93 = vmatpush1.xpose.msra.mxu0 %v86
    %94 = vmatprep.subr.mxu0 0.0
    %95 = vmatpush1.xpose.msra.mxu0 %v86
    %96 = vmatprep.subr.mxu0 0.0
    %97 = vmatpush1.xpose.msra.mxu0 %v86
    %98 = vmatprep.subr.mxu0 0.0
    %99 = vmatpush1.xpose.msra.mxu0 %v86
    %100 = vmatprep.subr.mxu0 0.0
    %101 = vmatpush1.xpose.msra.mxu0 %v86
    %102 = vmatprep.subr.mxu0 0.0
    %103 = vmatpush1.xpose.msra.mxu0 %v86
    %104 = vmatprep.subr.mxu0 0.0
    %105 = vmatpush1.xpose.msra.mxu0 %v86
    %106 = vmatprep.subr.mxu0 0.0
    %107 = vmatpush1.xpose.msra.mxu0 %v86
    %108 = vmatprep.subr.mxu0 0.0
    %109 = vmatpush1.xpose.msra.mxu0 %v86
    %110 = vmatprep.subr.mxu0 0.0
    %111 = vmatpush1.xpose.msra.mxu0 %v86
    %112 = vmatprep.subr.mxu0 0.0
    %113 = vmatpush1.xpose.msra.mxu0 %v86
    %114 = vmatprep.subr.mxu0 0.0
    %115 = vmatpush1.xpose.msra.mxu0 %v86
    %116 = vmatprep.subr.mxu0 0.0
    %117 = vmatpush1.xpose.msra.mxu0 %v86
    %118 = vmatprep.subr.mxu0 0.0
    %119 = vmatpush1.xpose.msra.mxu0 %v86
    %120 = vmatprep.subr.mxu0 0.0
    %121 = vmatpush1.xpose.msra.mxu0 0.0
    %122 = vmatprep.subr.mxu0 0.0
    %123 = vmatpush1.xpose.msra.mxu0 0.0
    %124 = vmatprep.subr.mxu0 0.0
    %125 = vmatpush1.xpose.msra.mxu0 0.0
    %126 = vmatprep.subr.mxu0 0.0
    %127 = vmatpush1.xpose.msra.mxu0 0.0
    %128 = vmatprep.subr.mxu0 0.0
    %129 = vmatpush1.xpose.msra.mxu0 0.0
    %130 = vmatprep.subr.mxu0 0.0
    %131 = vmatpush1.xpose.msra.mxu0 0.0
    %132 = vmatprep.subr.mxu0 0.0
    %133 = vmatpush1.xpose.msra.mxu0 0.0
    %134 = vmatprep.subr.mxu0 0.0
    %135 = vmatpush1.xpose.msra.mxu0 0.0
    %136 = vmatprep.subr.mxu0 0.0
    %137 = vmatpush1.xpose.msra.mxu0 0.0
    %138 = vmatprep.subr.mxu0 0.0
    %139 = vmatpush1.xpose.msra.mxu0 0.0
    %140 = vmatprep.subr.mxu0 0.0
    %141 = vmatpush1.xpose.msra.mxu0 0.0
    %142 = vmatprep.subr.mxu0 0.0
    %143 = vmatpush1.xpose.msra.mxu0 0.0
    %144 = vmatprep.subr.mxu0 0.0
    %145 = vmatpush1.xpose.msra.mxu0 0.0
    %146 = vmatprep.subr.mxu0 0.0
    %147 = vmatpush1.xpose.msra.mxu0 0.0
    %148 = vmatprep.subr.mxu0 0.0
    %149 = vmatpush1.xpose.msra.mxu0 0.0
    %150 = vmatprep.subr.mxu0 0.0
    %151 = vmatpush1.xpose.msra.mxu0 0.0
    %152 = vmatprep.mubr.f32.mxu0 0.0
    %153 = vmatmul.mubr.f32.gmra.mrb[0].mxu0 %v77
    %v154 = vpop.f32.mrb[0].mxu0
    %v155 = vadd.f32 0.0, %v154
    %v156 = vpop.f32.mrb[0].mxu0
    %157 = vdwg.mxu0
    %158 = vst [vmem:[#allocation8] sm:$0xff] %v155
    // Predicated region
    $region26: #{tpu_custom_call.1} parent=1 // pred_check
      _
    $region27: #{tpu_custom_call.1} parent=1 // pred_check_branch
      %160 = sbr.rel (0) target = $region29
    $region28: #{tpu_custom_call.1} parent=1 // pred_region
      %s162 = ssub.s32 128, 128
      %163 = vsyncadd [#allocation4], %s162
      %s165 = sshll.u32 [#allocation8], 4
      %s166 = int_to_ptr.vmem [resolvable:$true] %s165
      %168 = dma.vmem_to_hbm [thread:$0]  %s166, 128, %s3, [#allocation4]
    $region29: #{tpu_custom_call.1} parent=1 // pred_fallthru
      _
    // Predicated region
    $region30: #{tpu_custom_call.1} parent=1 // pred_check
      _
    $region31: #{tpu_custom_call.1} parent=1 // pred_check_branch
      %170 = sbr.rel (0) target = $region33
    $region32: #{tpu_custom_call.1} parent=1 // pred_region
      %171 = dma.done [#allocation4], 128
    $region33: #{tpu_custom_call.1} parent=1 // pred_fallthru
      _
    %172 = vsyncpa [#allocation3], 1
    %173 = vsyncpa [#allocation6], 1
    %174 = vsyncpa [#allocation4], 1

</llo_original>
